<compile_context>
chip_gen: v6e
topology: v6e:2x2x1
jax: 0.10.0
libtpu: 0.0.40
codegen_flags: <defaults>
</compile_context>

<pallas_src>
import functools
import math

import jax
import jax.numpy as jnp
import numpy as np
from jax import lax
from jax.experimental import pallas as pl
from jax.experimental.pallas import tpu as pltpu


def pam_kernel(xq_ref, xk_ref, mt_ref, c_ref, wv_ref, bv_ref, gamma_ref,
               out_ref, t_sc, m_sc, acc_sc, *, c_out, n_valid, apply_mask):
    ki = pl.program_id(2)

    @pl.when(ki == 0)
    def _init():
        # t[:, i] = M^T x_i + Wk bq  -- depends only on the query tile; key bias
        # is folded here so the hot KV loop has no extra matmul/add.
        xq = xq_ref[0]                                           # (C, tq)
        t = lax.dot_general(mt_ref[...], xq, (((1,), (0,)), ((), ())),
                            preferred_element_type=jnp.float32)
        t_sc[...] = (t + c_ref[...]).astype(t_sc.dtype)
        m_sc[...] = jnp.full_like(m_sc, -jnp.inf)
        acc_sc[...] = jnp.zeros_like(acc_sc)

    xk = xk_ref[0]                                               # (C, tk)

    # Value projection (1x1 conv) for this KV tile.  wv_ref carries an extra
    # all-zero row whose bias is 1, so row `c_out` of v is constant 1 and the
    # softmax row-sum falls out of the PV matmul below.
    v = lax.dot_general(wv_ref[...], xk, (((1,), (0,)), ((), ())),
                        preferred_element_type=jnp.float32) + bv_ref[...]
    v = v.astype(xk.dtype)                                       # (Cp, tk)

    # energy^T[j, i] = xk[:, j] . t[:, i]                        -> (tk, tq)
    # TODO(synk): check pl.lower_as_mlir that this dim-0 contraction on xk does
    # not emit a per-step vxpose; if it does, stream keys in (N, C) layout.
    s = lax.dot_general(xk, t_sc[...], (((0,), (0,)), ((), ())),
                        preferred_element_type=jnp.float32)

    if apply_mask:
        # Mask key columns that are spatial padding (N was rounded up to the
        # tile size).  Finite large-negative keeps exp() NaN-free.
        col = ki * s.shape[0] + lax.broadcasted_iota(jnp.int32, (s.shape[0], 1), 0)
        s = jnp.where(col < n_valid, s, jnp.float32(-1e30))

    # Online softmax over j (kv axis), deferred normalization, f32 statistics.
    m_new = jnp.maximum(m_sc[...], jnp.max(s, axis=0, keepdims=True))   # (1, tq)
    alpha = jnp.exp(m_sc[...] - m_new)                                  # (1, tq)
    p = jnp.exp(s - m_new).astype(xk.dtype)                             # (tk, tq)
    acc_sc[...] = alpha * acc_sc[...] + lax.dot_general(
        v, p, (((1,), (0,)), ((), ())), preferred_element_type=jnp.float32)
    m_sc[...] = m_new

    @pl.when(ki == pl.num_programs(2) - 1)
    def _finalize():
        xq = xq_ref[0].astype(jnp.float32)                       # residual
        l = acc_sc[c_out:c_out + 1, :]                           # (1, tq) row sums
        inv = gamma_ref[0, 0] * pl.reciprocal(l, approx=False)   # gamma folded in
        out_ref[0] = (acc_sc[:c_out, :] * inv + xq).astype(out_ref.dtype)


def _round_up(x, m):
    return ((x + m - 1) // m) * m


def _pick_tile(n, target):
    """Largest power-of-two multiple of 128 <= min(target, round_up(n, 128))."""
    cap = max(_round_up(n, 128), 128)
    t = 128
    while t * 2 <= min(target, cap):
        t *= 2
    return t


def _default_vmem_limit():
    # Generation-aware scoped-VMEM raise (v5e/v6e default 16/32 MiB is low);
    # capped below physical capacity so v7x (64 MiB) keeps headroom.
    try:
        cap = pltpu.get_tpu_info().vmem_capacity_bytes
        return int(min(96 * 1024 * 1024,
                       max(cap - 8 * 1024 * 1024, 16 * 1024 * 1024)))
    except Exception:
        return None


def pam_forward(x, wq, bq, wk, bk, wv, bv, gamma, *,
                tq=None, tk=None, compute_dtype=jnp.bfloat16,
                vmem_limit_bytes=None):
    """PAM_Module forward.  wq/wk: (C, C//8), wv: (C, C) as x@W matmul weights.

    bk is accepted for parity with the module but cancels in the softmax.
    compute_dtype feeds the MXU (and the HBM copy of x); softmax statistics and
    accumulation are always f32.
    """
    del bk
    B, C, H, W = x.shape
    N = H * W
    f32 = jnp.float32

    # Tiling: bias toward large tq (cuts key re-streaming, which scales with
    # N/tq); tk mainly amortizes per-grid-step overhead.
    if tq is None:
        tq = _pick_tile(N, 1024)
        # Keep at least 2 parallel (batch, q-tile) grid steps for multi-TC chips.
        while tq > 128 and B * (_round_up(N, tq) // tq) < 2:
            tq //= 2
    if tk is None:
        tk = _pick_tile(N, 512)
    assert tq % 128 == 0 and tk % 128 == 0, "tiles must be multiples of 128"

    Np = _round_up(N, math.lcm(tq, tk))
    needs_mask = Np != N

    x_bcn = x.reshape(B, C, N)
    if needs_mask:
        x_bcn = jnp.pad(x_bcn, ((0, 0), (0, 0), (0, Np - N)))
    x_bcn = x_bcn.astype(compute_dtype)

    # Weight folding in f32; only the MXU operands are cast to compute_dtype.
    m_t = (wk.astype(f32) @ wq.astype(f32).T).astype(compute_dtype)       # (C, C) = (Wq Wk^T)^T
    c_vec = wk.astype(f32) @ bq.astype(f32).reshape(-1, 1)                # (C, 1), stays f32
    Cp = _round_up(C + 1, 8)                                              # +1 row for the row-sum
    wv_aug = (jnp.zeros((Cp, C), f32).at[:C].set(wv.astype(f32).T)
              ).astype(compute_dtype)                                     # (Cp, C)
    bv_aug = (jnp.zeros((Cp, 1), f32)
              .at[:C, 0].set(bv.astype(f32).reshape(-1))
              .at[C, 0].set(1.0))                                         # ones row -> l
    gamma_sc = jnp.asarray(gamma, f32).reshape(1, 1)

    if vmem_limit_bytes is None:
        vmem_limit_bytes = _default_vmem_limit()
    cp_kwargs = dict(dimension_semantics=("parallel", "parallel", "arbitrary"))
    if vmem_limit_bytes is not None:
        cp_kwargs["vmem_limit_bytes"] = int(vmem_limit_bytes)

    kernel = functools.partial(pam_kernel, c_out=C, n_valid=N,
                               apply_mask=needs_mask)
    grid = (B, Np // tq, Np // tk)

    out_bcn = pl.pallas_call(
        kernel,
        out_shape=jax.ShapeDtypeStruct((B, C, Np), x.dtype),
        grid_spec=pltpu.PrefetchScalarGridSpec(
            num_scalar_prefetch=0,
            grid=grid,
            in_specs=[
                pl.BlockSpec((1, C, tq), lambda b, qi, ki: (b, 0, qi)),   # query tile
                pl.BlockSpec((1, C, tk), lambda b, qi, ki: (b, 0, ki)),   # key/value tile
                pl.BlockSpec((C, C), lambda b, qi, ki: (0, 0),
                             pipeline_mode=pl.Buffered(1)),               # M^T
                pl.BlockSpec((C, 1), lambda b, qi, ki: (0, 0),
                             pipeline_mode=pl.Buffered(1)),               # Wk bq
                pl.BlockSpec((Cp, C), lambda b, qi, ki: (0, 0),
                             pipeline_mode=pl.Buffered(1)),               # Wv^T (+ones row)
                pl.BlockSpec((Cp, 1), lambda b, qi, ki: (0, 0),
                             pipeline_mode=pl.Buffered(1)),               # bv (+1)
                pl.BlockSpec((1, 1), lambda b, qi, ki: (0, 0),
                             memory_space=pltpu.SMEM),                    # gamma
            ],
            out_specs=pl.BlockSpec((1, C, tq), lambda b, qi, ki: (b, 0, qi)),
            scratch_shapes=[
                pltpu.VMEM((C, tq), compute_dtype),   # t = M^T xq + c (MXU operand)
                pltpu.VMEM((1, tq), jnp.float32),     # running max
                pltpu.VMEM((Cp, tq), jnp.float32),    # f32 accumulator (+ row-sum row)
            ],
        ),
        compiler_params=pltpu.CompilerParams(**cp_kwargs),
    )(x_bcn, x_bcn, m_t, c_vec, wv_aug, bv_aug, gamma_sc)

    if needs_mask:
        out_bcn = out_bcn[:, :, :N]
    return out_bcn.reshape(B, C, H, W)


def pam_reference(x, wq, bq, wk, bk, wv, bv, gamma):
    """Pure-JAX reference reproducing the PyTorch PAM_Module forward exactly."""
    B, C, H, W = x.shape
    N = H * W
    x_bnc = jnp.transpose(x, (0, 2, 3, 1)).reshape(B, N, C).astype(jnp.float32)
    q = x_bnc @ wq + bq                               # (B, N, Cq)
    k = x_bnc @ wk + bk                               # (B, N, Cq)
    v = x_bnc @ wv + bv                               # (B, N, C)
    energy = jnp.einsum('bic,bjc->bij', q, k)
    attn = jax.nn.softmax(energy, axis=-1)
    out = jnp.einsum('bij,bjc->bic', attn, v)
    out = jnp.asarray(gamma, jnp.float32).reshape(()) * out + x_bnc
    return jnp.transpose(out.reshape(B, H, W, C), (0, 3, 1, 2)).astype(x.dtype)


if __name__ == "__main__":
    B, C, H, W = 2, 16, 16, 16        # in_dim must be divisible by 8
    Cq = C // 8

    key = jax.random.PRNGKey(0)
    kx, kq, kbq, kk, kbk, kv, kbv, kx2 = jax.random.split(key, 8)

    x = jax.random.normal(kx, (B, C, H, W), dtype=jnp.float32)
    wq = 0.1 * jax.random.normal(kq, (C, Cq), dtype=jnp.float32)
    bq = 0.1 * jax.random.normal(kbq, (Cq,), dtype=jnp.float32)
    wk = 0.1 * jax.random.normal(kk, (C, Cq), dtype=jnp.float32)
    bk = 0.1 * jax.random.normal(kbk, (Cq,), dtype=jnp.float32)
    wv = 0.1 * jax.random.normal(kv, (C, C), dtype=jnp.float32)
    bv = 0.1 * jax.random.normal(kbv, (C,), dtype=jnp.float32)
    # Module inits gamma to 0 (out == x); use nonzero to exercise attention.
    gamma = jnp.float32(0.5)

    ref = pam_reference(x, wq, bq, wk, bk, wv, bv, gamma)

    # 1) Exact-math path (f32 MXU operands), grid (B, 2, 2): tight check of the
    #    multi-KV-tile online softmax + folded row-sum / bias structure.
    out_f32 = pam_forward(x, wq, bq, wk, bk, wv, bv, gamma,
                          tq=128, tk=128, compute_dtype=jnp.float32)
    out_f32 = jax.block_until_ready(out_f32)
    np.testing.assert_allclose(np.asarray(out_f32), np.asarray(ref),
                               rtol=1e-3, atol=1e-3)

    # 2) Default bf16 MXU-operand path (f32 softmax stats / accumulation).
    out_bf16 = jax.block_until_ready(
        pam_forward(x, wq, bq, wk, bk, wv, bv, gamma, tq=128, tk=128))
    np.testing.assert_allclose(np.asarray(out_bf16), np.asarray(ref),
                               rtol=3e-2, atol=3e-2)

    # 3) Spatial size not a multiple of 128 -> exercises key padding + masking.
    H2 = W2 = 12
    x2 = jax.random.normal(kx2, (B, C, H2, W2), dtype=jnp.float32)
    ref2 = pam_reference(x2, wq, bq, wk, bk, wv, bv, gamma)
    out2 = jax.block_until_ready(
        pam_forward(x2, wq, bq, wk, bk, wv, bv, gamma,
                    tq=128, tk=128, compute_dtype=jnp.float32))
    np.testing.assert_allclose(np.asarray(out2), np.asarray(ref2),
                               rtol=1e-3, atol=1e-3)

    print("KERNEL_OK")
</pallas_src>

<mosaic_0001>
module attributes {stable_mosaic.version = 11 : i64} {
  func.func @pam_kernel(%arg0: i32, %arg1: i32, %arg2: i32, %arg3: memref<1x16x128xf32, #tpu.memory_space<vmem>>, %arg4: memref<1x16x128xf32, #tpu.memory_space<vmem>>, %arg5: memref<16x16xf32, #tpu.memory_space<vmem>>, %arg6: memref<16x1xf32, #tpu.memory_space<vmem>>, %arg7: memref<24x16xf32, #tpu.memory_space<vmem>>, %arg8: memref<24x1xf32, #tpu.memory_space<vmem>>, %arg9: memref<1x1xf32, #tpu.memory_space<smem>>, %arg10: memref<1x16x128xf32, #tpu.memory_space<vmem>>, %arg11: memref<16x128xf32, #tpu.memory_space<vmem>>, %arg12: memref<1x128xf32, #tpu.memory_space<vmem>>, %arg13: memref<24x128xf32, #tpu.memory_space<vmem>>) attributes {dimension_semantics = [#tpu.dimension_semantics<parallel>, #tpu.dimension_semantics<parallel>, #tpu.dimension_semantics<arbitrary>], iteration_bounds = array<i64: 2, 2, 2>, scalar_prefetch = 0 : i64, scratch_operands = 3 : i64, tpu.core_type = #tpu.core_type<tc>, window_params = [{transform_indices = @transform_0, window_bounds = array<i64: 1, 16, 128>}, {transform_indices = @transform_1, window_bounds = array<i64: 1, 16, 128>}, {pipeline_mode = #tpu.pipeline_mode<synchronous>, transform_indices = @transform_2, window_bounds = array<i64: 16, 16>}, {pipeline_mode = #tpu.pipeline_mode<synchronous>, transform_indices = @transform_3, window_bounds = array<i64: 16, 1>}, {pipeline_mode = #tpu.pipeline_mode<synchronous>, transform_indices = @transform_4, window_bounds = array<i64: 24, 16>}, {pipeline_mode = #tpu.pipeline_mode<synchronous>, transform_indices = @transform_5, window_bounds = array<i64: 24, 1>}, {transform_indices = @transform_6, window_bounds = array<i64: 1, 1>}, {transform_indices = @transform_7, window_bounds = array<i64: 1, 16, 128>}]} {
    %c0_i32 = arith.constant 0 : i32
    %0 = arith.cmpi eq, %arg2, %c0_i32 : i32
    %1 = arith.extui %0 : i1 to i32
    %c0_i32_0 = arith.constant 0 : i32
    %2 = arith.cmpi ne, %1, %c0_i32_0 : i32
    scf.if %2 {
      %c0_23 = arith.constant 0 : index
      %c0_24 = arith.constant 0 : index
      %c0_25 = arith.constant 0 : index
      %32 = vector.load %arg3[%c0_23, %c0_24, %c0_25] : memref<1x16x128xf32, #tpu.memory_space<vmem>>, vector<1x16x128xf32>
      %33 = vector.shape_cast %32 : vector<1x16x128xf32> to vector<16x128xf32>
      %c0_26 = arith.constant 0 : index
      %c0_27 = arith.constant 0 : index
      %34 = vector.load %arg5[%c0_26, %c0_27] : memref<16x16xf32, #tpu.memory_space<vmem>>, vector<16x16xf32>
      %cst_28 = arith.constant dense<0.000000e+00> : vector<16x128xf32>
      %35 = tpu.matmul %34, %33, %cst_28 {dimension_numbers = #tpu.dot_dimension_numbers<[1], [0], [0], [1], [0, 0, 1, 1], [], []>} : vector<16x16xf32>, vector<16x128xf32>, vector<16x128xf32> -> vector<16x128xf32>
      %c0_29 = arith.constant 0 : index
      %c0_30 = arith.constant 0 : index
      %36 = vector.load %arg6[%c0_29, %c0_30] : memref<16x1xf32, #tpu.memory_space<vmem>>, vector<16x1xf32>
      %37 = vector.broadcast %36 : vector<16x1xf32> to vector<16x128xf32>
      %38 = arith.addf %35, %37 : vector<16x128xf32>
      %c0_31 = arith.constant 0 : index
      %c0_32 = arith.constant 0 : index
      %39 = vector.load %arg11[%c0_31, %c0_32] : memref<16x128xf32, #tpu.memory_space<vmem>>, vector<16x128xf32>
      tpu.vector_store %arg11[%c0_31, %c0_32], %38 {strides = array<i32>} : memref<16x128xf32, #tpu.memory_space<vmem>>, vector<16x128xf32>,
      %cst_33 = arith.constant 0xFF800000 : f32
      %40 = vector.broadcast %cst_33 : f32 to vector<1x128xf32>
      %c0_34 = arith.constant 0 : index
      %c0_35 = arith.constant 0 : index
      %41 = vector.load %arg12[%c0_34, %c0_35] : memref<1x128xf32, #tpu.memory_space<vmem>>, vector<1x128xf32>
      tpu.vector_store %arg12[%c0_34, %c0_35], %40 {strides = array<i32>} : memref<1x128xf32, #tpu.memory_space<vmem>>, vector<1x128xf32>,
      %cst_36 = arith.constant 0.000000e+00 : f32
      %42 = vector.broadcast %cst_36 : f32 to vector<24x128xf32>
      %c0_37 = arith.constant 0 : index
      %c0_38 = arith.constant 0 : index
      %43 = vector.load %arg13[%c0_37, %c0_38] : memref<24x128xf32, #tpu.memory_space<vmem>>, vector<24x128xf32>
      tpu.vector_store %arg13[%c0_37, %c0_38], %42 {strides = array<i32>} : memref<24x128xf32, #tpu.memory_space<vmem>>, vector<24x128xf32>,
    } else {
    }
    %c0 = arith.constant 0 : index
    %c0_1 = arith.constant 0 : index
    %c0_2 = arith.constant 0 : index
    %3 = vector.load %arg4[%c0, %c0_1, %c0_2] : memref<1x16x128xf32, #tpu.memory_space<vmem>>, vector<1x16x128xf32>
    %4 = vector.shape_cast %3 : vector<1x16x128xf32> to vector<16x128xf32>
    %c0_3 = arith.constant 0 : index
    %c0_4 = arith.constant 0 : index
    %5 = vector.load %arg7[%c0_3, %c0_4] : memref<24x16xf32, #tpu.memory_space<vmem>>, vector<24x16xf32>
    %cst = arith.constant dense<0.000000e+00> : vector<24x128xf32>
    %6 = tpu.matmul %5, %4, %cst {dimension_numbers = #tpu.dot_dimension_numbers<[1], [0], [0], [1], [0, 0, 1, 1], [], []>} : vector<24x16xf32>, vector<16x128xf32>, vector<24x128xf32> -> vector<24x128xf32>
    %c0_5 = arith.constant 0 : index
    %c0_6 = arith.constant 0 : index
    %7 = vector.load %arg8[%c0_5, %c0_6] : memref<24x1xf32, #tpu.memory_space<vmem>>, vector<24x1xf32>
    %8 = vector.broadcast %7 : vector<24x1xf32> to vector<24x128xf32>
    %9 = arith.addf %6, %8 : vector<24x128xf32>
    %c0_7 = arith.constant 0 : index
    %c0_8 = arith.constant 0 : index
    %10 = vector.load %arg11[%c0_7, %c0_8] : memref<16x128xf32, #tpu.memory_space<vmem>>, vector<16x128xf32>
    %cst_9 = arith.constant dense<0.000000e+00> : vector<128x128xf32>
    %11 = tpu.matmul %4, %10, %cst_9 {dimension_numbers = #tpu.dot_dimension_numbers<[0], [0], [1], [1], [0, 1, 1, 1], [], []>} : vector<16x128xf32>, vector<16x128xf32>, vector<128x128xf32> -> vector<128x128xf32>
    %c0_10 = arith.constant 0 : index
    %c0_11 = arith.constant 0 : index
    %12 = vector.load %arg12[%c0_10, %c0_11] : memref<1x128xf32, #tpu.memory_space<vmem>>, vector<1x128xf32>
    %cst_12 = arith.constant dense<0xFF800000> : vector<128xf32>
    %13 = vector.multi_reduction <maximumf>, %11, %cst_12 [0] : vector<128x128xf32> to vector<128xf32>
    %14 = vector.shape_cast %13 : vector<128xf32> to vector<1x128xf32>
    %15 = arith.maximumf %12, %14 : vector<1x128xf32>
    %c0_13 = arith.constant 0 : index
    %c0_14 = arith.constant 0 : index
    %16 = vector.load %arg12[%c0_13, %c0_14] : memref<1x128xf32, #tpu.memory_space<vmem>>, vector<1x128xf32>
    %17 = arith.subf %16, %15 : vector<1x128xf32>
    %18 = math.exp %17 : vector<1x128xf32>
    %19 = vector.broadcast %15 : vector<1x128xf32> to vector<128x128xf32>
    %20 = arith.subf %11, %19 : vector<128x128xf32>
    %21 = math.exp %20 : vector<128x128xf32>
    %c0_15 = arith.constant 0 : index
    %c0_16 = arith.constant 0 : index
    %22 = vector.load %arg13[%c0_15, %c0_16] : memref<24x128xf32, #tpu.memory_space<vmem>>, vector<24x128xf32>
    %23 = vector.broadcast %18 : vector<1x128xf32> to vector<24x128xf32>
    %24 = arith.mulf %23, %22 : vector<24x128xf32>
    %cst_17 = arith.constant dense<0.000000e+00> : vector<24x128xf32>
    %25 = tpu.matmul %9, %21, %cst_17 {dimension_numbers = #tpu.dot_dimension_numbers<[1], [0], [0], [1], [0, 0, 1, 1], [], []>} : vector<24x128xf32>, vector<128x128xf32>, vector<24x128xf32> -> vector<24x128xf32>
    %26 = arith.addf %24, %25 : vector<24x128xf32>
    %c0_18 = arith.constant 0 : index
    %c0_19 = arith.constant 0 : index
    %27 = vector.load %arg13[%c0_18, %c0_19] : memref<24x128xf32, #tpu.memory_space<vmem>>, vector<24x128xf32>
    tpu.vector_store %arg13[%c0_18, %c0_19], %26 {strides = array<i32>} : memref<24x128xf32, #tpu.memory_space<vmem>>, vector<24x128xf32>,
    %c0_20 = arith.constant 0 : index
    %c0_21 = arith.constant 0 : index
    %28 = vector.load %arg12[%c0_20, %c0_21] : memref<1x128xf32, #tpu.memory_space<vmem>>, vector<1x128xf32>
    tpu.vector_store %arg12[%c0_20, %c0_21], %15 {strides = array<i32>} : memref<1x128xf32, #tpu.memory_space<vmem>>, vector<1x128xf32>,
    %c1_i32 = arith.constant 1 : i32
    %29 = arith.cmpi eq, %arg2, %c1_i32 : i32
    %30 = arith.extui %29 : i1 to i32
    %c0_i32_22 = arith.constant 0 : i32
    %31 = arith.cmpi ne, %30, %c0_i32_22 : i32
    scf.if %31 {
      %c0_23 = arith.constant 0 : index
      %c0_24 = arith.constant 0 : index
      %c0_25 = arith.constant 0 : index
      %32 = vector.load %arg3[%c0_23, %c0_24, %c0_25] : memref<1x16x128xf32, #tpu.memory_space<vmem>>, vector<1x16x128xf32>
      %33 = vector.shape_cast %32 : vector<1x16x128xf32> to vector<16x128xf32>
      %c16 = arith.constant 16 : index
      %c0_26 = arith.constant 0 : index
      %34 = vector.load %arg13[%c16, %c0_26] : memref<24x128xf32, #tpu.memory_space<vmem>>, vector<1x128xf32>
      %c0_27 = arith.constant 0 : index
      %c0_28 = arith.constant 0 : index
      %35 = memref.load %arg9[%c0_27, %c0_28] : memref<1x1xf32, #tpu.memory_space<smem>>
      %36 = tpu.reciprocal %34 : vector<1x128xf32> -> vector<1x128xf32>
      %37 = vector.broadcast %35 : f32 to vector<1x128xf32>
      %38 = arith.mulf %37, %36 : vector<1x128xf32>
      %c0_29 = arith.constant 0 : index
      %c0_30 = arith.constant 0 : index
      %39 = vector.load %arg13[%c0_29, %c0_30] : memref<24x128xf32, #tpu.memory_space<vmem>>, vector<16x128xf32>
      %40 = vector.broadcast %38 : vector<1x128xf32> to vector<16x128xf32>
      %41 = arith.mulf %39, %40 : vector<16x128xf32>
      %42 = arith.addf %41, %33 : vector<16x128xf32>
      %c0_31 = arith.constant 0 : index
      %c0_32 = arith.constant 0 : index
      %c0_33 = arith.constant 0 : index
      %43 = vector.load %arg10[%c0_31, %c0_32, %c0_33] : memref<1x16x128xf32, #tpu.memory_space<vmem>>, vector<1x16x128xf32>
      %44 = vector.shape_cast %43 : vector<1x16x128xf32> to vector<16x128xf32>
      %45 = vector.shape_cast %42 : vector<16x128xf32> to vector<1x16x128xf32>
      tpu.vector_store %arg10[%c0_31, %c0_32, %c0_33], %45 {strides = array<i32>} : memref<1x16x128xf32, #tpu.memory_space<vmem>>, vector<1x16x128xf32>,
    } else {
    }
    return
  }
  func.func @transform_0(%arg0: i32, %arg1: i32, %arg2: i32) -> (i32, i32, i32) {
    %c0_i32 = arith.constant 0 : i32
    %c0_i32_0 = arith.constant 0 : i32
    return %arg0, %c0_i32, %arg1 : i32, i32, i32
  }
  func.func @transform_1(%arg0: i32, %arg1: i32, %arg2: i32) -> (i32, i32, i32) {
    %c0_i32 = arith.constant 0 : i32
    %c0_i32_0 = arith.constant 0 : i32
    return %arg0, %c0_i32, %arg2 : i32, i32, i32
  }
  func.func @transform_2(%arg0: i32, %arg1: i32, %arg2: i32) -> (i32, i32) {
    %c0_i32 = arith.constant 0 : i32
    %c0_i32_0 = arith.constant 0 : i32
    %c0_i32_1 = arith.constant 0 : i32
    return %c0_i32, %c0_i32_0 : i32, i32
  }
  func.func @transform_3(%arg0: i32, %arg1: i32, %arg2: i32) -> (i32, i32) {
    %c0_i32 = arith.constant 0 : i32
    %c0_i32_0 = arith.constant 0 : i32
    %c0_i32_1 = arith.constant 0 : i32
    return %c0_i32, %c0_i32_0 : i32, i32
  }
  func.func @transform_4(%arg0: i32, %arg1: i32, %arg2: i32) -> (i32, i32) {
    %c0_i32 = arith.constant 0 : i32
    %c0_i32_0 = arith.constant 0 : i32
    %c0_i32_1 = arith.constant 0 : i32
    return %c0_i32, %c0_i32_0 : i32, i32
  }
  func.func @transform_5(%arg0: i32, %arg1: i32, %arg2: i32) -> (i32, i32) {
    %c0_i32 = arith.constant 0 : i32
    %c0_i32_0 = arith.constant 0 : i32
    %c0_i32_1 = arith.constant 0 : i32
    return %c0_i32, %c0_i32_0 : i32, i32
  }
  func.func @transform_6(%arg0: i32, %arg1: i32, %arg2: i32) -> (i32, i32) {
    %c0_i32 = arith.constant 0 : i32
    %c0_i32_0 = arith.constant 0 : i32
    %c0_i32_1 = arith.constant 0 : i32
    return %c0_i32, %c0_i32_0 : i32, i32
  }
  func.func @transform_7(%arg0: i32, %arg1: i32, %arg2: i32) -> (i32, i32, i32) {
    %c0_i32 = arith.constant 0 : i32
    %c0_i32_0 = arith.constant 0 : i32
    return %arg0, %c0_i32, %arg1 : i32, i32, i32
  }
}

</mosaic_0001>

<llo_original>
// kernel: tpu_custom_call.1
$region0: #{tpu_custom_call.1}
  #allocation0 [shape = 'u32[]', space=smem, size = 0x4, offset = 0x4, fixed_abs, tag = 'smem constant byte address 0x4 - core index']
  #allocation1 [shape = 'u32[144,128]{1,0:T(1,128)}', space=vmem, size = 0x12000, scoped, tag = 'internal scratch']
  #allocation2 [shape = 'f32[16,128]{1,0:T(8,128)}', space=vmem, size = 0x2000, scoped, tag = 'scratch operand']
  #allocation3 [shape = 'f32[1,128]{1,0:T(1,128)}', space=vmem, size = 0x200, scoped, tag = 'scratch operand']
  #allocation4 [shape = 'f32[24,128]{1,0:T(8,128)}', space=vmem, size = 0x3000, scoped, tag = 'scratch operand']
  #allocation5 [shape = 'f32[1,1]{1,0:T(1,128)S(6)}', space=smem, size = 0x200, scoped, tag = 'scoped memory for tpu_custom_call.1']
  %s0 = inlined_call_operand.vmem [shape: f32[2,16,256], index: 0, kind: input, shape index: {}]
  %s1 = inlined_call_operand.hbm [shape: f32[2,16,256], index: 1, kind: input, shape index: {}]
  %s2 = inlined_call_operand.hbm [shape: f32[16,16], index: 2, kind: input, shape index: {}]
  %s3 = inlined_call_operand.vmem [shape: f32[16,1], index: 3, kind: input, shape index: {}]
  %s4 = inlined_call_operand.vmem [shape: f32[24,16], index: 4, kind: input, shape index: {}]
  %s5 = inlined_call_operand.vmem [shape: f32[24,1], index: 5, kind: input, shape index: {}]
  %s6 = inlined_call_operand.<no memory space> [shape: f32[1,1], index: 6, kind: input, shape index: {}]
  %s7 = inlined_call_operand.hbm [shape: f32[2,16,256], index: 7, kind: output, shape index: {}]
  %s8 = sld [smem:[#allocation0]]
  $region115: #{tpu_custom_call.1} parent=0
    _
  %s10 = ssub.s32 1, %s8
  %s11 = scalar_select 0, %s10, %s8
  %12 = sst [smem:[#allocation5]] %s6
  $region1: #{tpu_custom_call.1} parent=0
    #allocation6 [shape = 'u8[16384]{0}', space=vmem, size = 0x4000, scoped, tag = 'input window, operand 0']
    #allocation7 [shape = 'u8[16384]{0}', space=vmem, size = 0x4000, scoped, tag = 'input window, operand 1']
    #allocation8 [shape = 's32[2]{0}', space=sflag, size = 0x8, scoped, tag = 'scoped memory for tpu_custom_call.1']
    #allocation9 [shape = 's32[2]{0}', space=sflag, size = 0x8, scoped, tag = 'scoped memory for tpu_custom_call.1']
    #allocation10 [shape = 'u8[8192]{0}', space=vmem, size = 0x2000, scoped, tag = 'input window, operand 2, single buffered']
    #allocation11 [shape = 's32[1]{0}', space=sflag, size = 0x4, scoped, tag = 'scoped memory for tpu_custom_call.1']
    #allocation12 [shape = 'u8[16384]{0}', space=vmem, size = 0x4000, scoped, tag = 'output window, operand 0']
    %13 = vsyncpa [#allocation8], 0
    %s14 = scalar_lea.sflag [#allocation8], 1
    %15 = vsyncpa %s14, 0
    %16 = vsyncpa [#allocation11], 0
    %17 = vsyncpa [#allocation9], 0
    %s18 = scalar_lea.sflag [#allocation9], 1
    %19 = vsyncpa %s18, 0
    loop: start=0, step=1, limit=10
    $region2: #{tpu_custom_call.1} parent=1 // loop_pre_header
      _
    $region3: #{tpu_custom_call.1} parent=1 // loop_header
      %s21 = sphi 0, %s25
      %p22 = scmp.ge.s32.totalorder %s21, 10
      %s28 = sphi 0, %s47
      %s29 = sphi 0, %s43
      %s30 = sphi 0, %s39
      %s31 = sphi 0, %s28
      %s32 = sphi 0, %s29
      %s33 = sphi 0, %s30
      %s34 = sphi 0, %s31
      %s35 = sphi 0, %s32
      %s36 = sphi 0, %s33
      %s52 = sphi 0, %s54
      %s55 = sphi 0, %s52
      %s56 = sphi 0, %s55
      %s72 = sphi 0, %s56
      %s80 = sphi 0, %s82
      %s83 = sphi 0, %s80
      %s84 = sphi 0, %s83
      %s100 = sphi 0, %s84
      %s104 = sphi 0, %s104
      %s106 = sphi 0, %s104
      %s107 = sphi 0, %s106
      %s121 = sphi 0, %s107
      %s125 = sphi 0, %s125
      %s127 = sphi 0, %s125
      %s128 = sphi 0, %s127
      %s142 = sphi 0, %s128
      %s146 = sphi 0, %s146
      %s148 = sphi 0, %s146
      %s149 = sphi 0, %s148
      %s163 = sphi 0, %s149
      %s167 = sphi 0, %s167
      %s169 = sphi 0, %s167
      %s170 = sphi 0, %s169
      %s184 = sphi 0, %s170
      %s188 = sphi 0, %s188
      %s190 = sphi 0, %s188
      %s191 = sphi 0, %s190
      %s205 = sphi 0, %s191
      %s213 = sphi 0, %s215
      %s216 = sphi 0, %s213
      %s217 = sphi 0, %s216
      %s233 = sphi 0, %s217
    $region4: #{tpu_custom_call.1} parent=1 // loop_header_branch
      %24 = sbr.rel (%p22) target = $region8
    $region5: #{tpu_custom_call.1} parent=1 // loop_body
      %s26 = ssub.s32 %s21, 1
      %s27 = ssub.s32 %s21, 2
      %s37 = sadd.s32 1, %s30
      %p38 = scmp.ge.s32.totalorder %s37, 2
      %s39 = scalar_select %p38, 0, %s37
      %s40 = sadd.s32 1, %s29
      %s41 = scalar_select %p38, %s40, %s29
      %p42 = scmp.ge.s32.totalorder %s41, 2
      %s43 = scalar_select %p42, 0, %s41
      %s44 = sadd.s32 1, %s28
      %s45 = scalar_select %p42, %s44, %s28
      %p46 = scmp.ge.s32.totalorder %s45, 2
      %s47 = scalar_select %p46, 0, %s45
      %s48 = ssub.s32 %s28, %s47
      %s49 = ssub.s32 %s29, %s43
      %s50 = sor.u32 %s48, %s49
      %p51 = scmp.eq.s32.totalorder %s50, 0
      %s53 = sadd.s32 %s52, 1
      %s54 = scalar_select %p51, %s52, %s53
      %p57 = pneg %p51
      %p58 = scmp.eq.s32.totalorder %s21, 7
      %p59 = por %p57, %p58
      %p60 = scmp.ne.s32.totalorder %s52, %s55
      %p61 = scmp.eq.s32.totalorder %s21, 0
      %p62 = por %p60, %p61
      %p63 = scmp.ne.s32.totalorder %s52, %s55
      %p64 = scmp.eq.s32.totalorder %s26, 7
      %p65 = por %p63, %p64
      %p66 = scmp.ne.s32.totalorder %s55, %s56
      %p67 = scmp.eq.s32.totalorder %s26, 0
      %p68 = por %p66, %p67
      %p69 = scmp.ne.s32.totalorder %s55, %s56
      %p70 = scmp.eq.s32.totalorder %s27, 7
      %p71 = por %p69, %p70
      %p73 = scmp.ne.s32.totalorder %s56, %s72
      %p74 = scmp.eq.s32.totalorder %s27, 0
      %p75 = por %p73, %p74
      %s76 = ssub.s32 %s28, %s47
      %s77 = ssub.s32 %s30, %s39
      %s78 = sor.u32 %s76, %s77
      %p79 = scmp.eq.s32.totalorder %s78, 0
      %s81 = sadd.s32 %s80, 1
      %s82 = scalar_select %p79, %s80, %s81
      %p85 = pneg %p79
      %p86 = scmp.eq.s32.totalorder %s21, 7
      %p87 = por %p85, %p86
      %p88 = scmp.ne.s32.totalorder %s80, %s83
      %p89 = scmp.eq.s32.totalorder %s21, 0
      %p90 = por %p88, %p89
      %p91 = scmp.ne.s32.totalorder %s80, %s83
      %p92 = scmp.eq.s32.totalorder %s26, 7
      %p93 = por %p91, %p92
      %p94 = scmp.ne.s32.totalorder %s83, %s84
      %p95 = scmp.eq.s32.totalorder %s26, 0
      %p96 = por %p94, %p95
      %p97 = scmp.ne.s32.totalorder %s83, %s84
      %p98 = scmp.eq.s32.totalorder %s27, 7
      %p99 = por %p97, %p98
      %p101 = scmp.ne.s32.totalorder %s84, %s100
      %p102 = scmp.eq.s32.totalorder %s27, 0
      %p103 = por %p101, %p102
      %s105 = sadd.s32 %s104, 1
      %p108 = scmp.eq.s32.totalorder %s21, 7
      %p109 = scmp.ne.s32.totalorder %s104, %s106
      %p110 = scmp.eq.s32.totalorder %s21, 0
      %p111 = por %p109, %p110
      %p112 = scmp.ne.s32.totalorder %s104, %s106
      %p113 = scmp.eq.s32.totalorder %s26, 7
      %p114 = por %p112, %p113
      %p115 = scmp.ne.s32.totalorder %s106, %s107
      %p116 = scmp.eq.s32.totalorder %s26, 0
      %p117 = por %p115, %p116
      %p118 = scmp.ne.s32.totalorder %s106, %s107
      %p119 = scmp.eq.s32.totalorder %s27, 7
      %p120 = por %p118, %p119
      %p122 = scmp.ne.s32.totalorder %s107, %s121
      %p123 = scmp.eq.s32.totalorder %s27, 0
      %p124 = por %p122, %p123
      %s126 = sadd.s32 %s125, 1
      %p129 = scmp.eq.s32.totalorder %s21, 7
      %p130 = scmp.ne.s32.totalorder %s125, %s127
      %p131 = scmp.eq.s32.totalorder %s21, 0
      %p132 = por %p130, %p131
      %p133 = scmp.ne.s32.totalorder %s125, %s127
      %p134 = scmp.eq.s32.totalorder %s26, 7
      %p135 = por %p133, %p134
      %p136 = scmp.ne.s32.totalorder %s127, %s128
      %p137 = scmp.eq.s32.totalorder %s26, 0
      %p138 = por %p136, %p137
      %p139 = scmp.ne.s32.totalorder %s127, %s128
      %p140 = scmp.eq.s32.totalorder %s27, 7
      %p141 = por %p139, %p140
      %p143 = scmp.ne.s32.totalorder %s128, %s142
      %p144 = scmp.eq.s32.totalorder %s27, 0
      %p145 = por %p143, %p144
      %s147 = sadd.s32 %s146, 1
      %p150 = scmp.eq.s32.totalorder %s21, 7
      %p151 = scmp.ne.s32.totalorder %s146, %s148
      %p152 = scmp.eq.s32.totalorder %s21, 0
      %p153 = por %p151, %p152
      %p154 = scmp.ne.s32.totalorder %s146, %s148
      %p155 = scmp.eq.s32.totalorder %s26, 7
      %p156 = por %p154, %p155
      %p157 = scmp.ne.s32.totalorder %s148, %s149
      %p158 = scmp.eq.s32.totalorder %s26, 0
      %p159 = por %p157, %p158
      %p160 = scmp.ne.s32.totalorder %s148, %s149
      %p161 = scmp.eq.s32.totalorder %s27, 7
      %p162 = por %p160, %p161
      %p164 = scmp.ne.s32.totalorder %s149, %s163
      %p165 = scmp.eq.s32.totalorder %s27, 0
      %p166 = por %p164, %p165
      %s168 = sadd.s32 %s167, 1
      %p171 = scmp.eq.s32.totalorder %s21, 7
      %p172 = scmp.ne.s32.totalorder %s167, %s169
      %p173 = scmp.eq.s32.totalorder %s21, 0
      %p174 = por %p172, %p173
      %p175 = scmp.ne.s32.totalorder %s167, %s169
      %p176 = scmp.eq.s32.totalorder %s26, 7
      %p177 = por %p175, %p176
      %p178 = scmp.ne.s32.totalorder %s169, %s170
      %p179 = scmp.eq.s32.totalorder %s26, 0
      %p180 = por %p178, %p179
      %p181 = scmp.ne.s32.totalorder %s169, %s170
      %p182 = scmp.eq.s32.totalorder %s27, 7
      %p183 = por %p181, %p182
      %p185 = scmp.ne.s32.totalorder %s170, %s184
      %p186 = scmp.eq.s32.totalorder %s27, 0
      %p187 = por %p185, %p186
      %s189 = sadd.s32 %s188, 1
      %p192 = scmp.eq.s32.totalorder %s21, 7
      %p193 = scmp.ne.s32.totalorder %s188, %s190
      %p194 = scmp.eq.s32.totalorder %s21, 0
      %p195 = por %p193, %p194
      %p196 = scmp.ne.s32.totalorder %s188, %s190
      %p197 = scmp.eq.s32.totalorder %s26, 7
      %p198 = por %p196, %p197
      %p199 = scmp.ne.s32.totalorder %s190, %s191
      %p200 = scmp.eq.s32.totalorder %s26, 0
      %p201 = por %p199, %p200
      %p202 = scmp.ne.s32.totalorder %s190, %s191
      %p203 = scmp.eq.s32.totalorder %s27, 7
      %p204 = por %p202, %p203
      %p206 = scmp.ne.s32.totalorder %s191, %s205
      %p207 = scmp.eq.s32.totalorder %s27, 0
      %p208 = por %p206, %p207
      %s209 = ssub.s32 %s28, %s47
      %s210 = ssub.s32 %s29, %s43
      %s211 = sor.u32 %s209, %s210
      %p212 = scmp.eq.s32.totalorder %s211, 0
      %s214 = sadd.s32 %s213, 1
      %s215 = scalar_select %p212, %s213, %s214
      %p218 = pneg %p212
      %p219 = scmp.eq.s32.totalorder %s21, 7
      %p220 = por %p218, %p219
      %p221 = scmp.ne.s32.totalorder %s213, %s216
      %p222 = scmp.eq.s32.totalorder %s21, 0
      %p223 = por %p221, %p222
      %p224 = scmp.ne.s32.totalorder %s213, %s216
      %p225 = scmp.eq.s32.totalorder %s26, 7
      %p226 = por %p224, %p225
      %p227 = scmp.ne.s32.totalorder %s216, %s217
      %p228 = scmp.eq.s32.totalorder %s26, 0
      %p229 = por %p227, %p228
      %p230 = scmp.ne.s32.totalorder %s216, %s217
      %p231 = scmp.eq.s32.totalorder %s27, 7
      %p232 = por %p230, %p231
      %p234 = scmp.ne.s32.totalorder %s217, %s233
      %p235 = scmp.eq.s32.totalorder %s27, 0
      %p236 = por %p234, %p235
      %p237 = scmp.le.s32.totalorder 1, %s21
      %p238 = scmp.lt.s32.totalorder %s21, 9
      %p239 = pnand %p237, %p238
      %p240 = pneg %p239
      // Predicated region
      $region9: #{tpu_custom_call.1} parent=5 // pred_check
        _
      $region10: #{tpu_custom_call.1} parent=5 // pred_check_branch
        %242 = sbr.rel (%p239) target = $region12
      $region11: #{tpu_custom_call.1} parent=5 // pred_region
        %s243 = ssub.s32 %s21, 1
        // Predicated region
        $region13: #{tpu_custom_call.1} parent=11 // pred_check
          %p244 = pneg %p117
        $region14: #{tpu_custom_call.1} parent=11 // pred_check_branch
          %246 = sbr.rel (%p244) target = $region16
        $region15: #{tpu_custom_call.1} parent=11 // pred_region
          %s248 = ssub.s32 256, 256
          %249 = vsyncadd [#allocation11], %s248
          %s250 = sshll.u32 [#allocation10], 4
          %s251 = int_to_ptr.vmem [resolvable:$true] %s250
          %256 = dma.hbm_to_vmem [thread:$0]  %s2, 256, %s251, [#allocation11], 128, 128, 8
        $region16: #{tpu_custom_call.1} parent=11 // pred_fallthru
          _
        // Predicated region
        $region17: #{tpu_custom_call.1} parent=11 // pred_check
          %p257 = pneg %p138
        $region18: #{tpu_custom_call.1} parent=11 // pred_check_branch
          %259 = sbr.rel (%p257) target = $region20
        $region19: #{tpu_custom_call.1} parent=11 // pred_region
          _
        $region20: #{tpu_custom_call.1} parent=11 // pred_fallthru
          _
        // Predicated region
        $region21: #{tpu_custom_call.1} parent=11 // pred_check
          %p260 = pneg %p159
        $region22: #{tpu_custom_call.1} parent=11 // pred_check_branch
          %262 = sbr.rel (%p260) target = $region24
        $region23: #{tpu_custom_call.1} parent=11 // pred_region
          _
        $region24: #{tpu_custom_call.1} parent=11 // pred_fallthru
          _
        // Predicated region
        $region25: #{tpu_custom_call.1} parent=11 // pred_check
          %p263 = pneg %p180
        $region26: #{tpu_custom_call.1} parent=11 // pred_check_branch
          %265 = sbr.rel (%p263) target = $region28
        $region27: #{tpu_custom_call.1} parent=11 // pred_region
          _
        $region28: #{tpu_custom_call.1} parent=11 // pred_fallthru
          _
        // Predicated region
        $region29: #{tpu_custom_call.1} parent=11 // pred_check
          %p266 = pneg %p201
        $region30: #{tpu_custom_call.1} parent=11 // pred_check_branch
          %268 = sbr.rel (%p266) target = $region32
        $region31: #{tpu_custom_call.1} parent=11 // pred_region
          _
        $region32: #{tpu_custom_call.1} parent=11 // pred_fallthru
          _
      $region12: #{tpu_custom_call.1} parent=5 // pred_fallthru
        _
      %p269 = scmp.lt.s32.totalorder %s21, 8
      // Predicated region
      $region33: #{tpu_custom_call.1} parent=5 // pred_check
        %p270 = pneg %p269
      $region34: #{tpu_custom_call.1} parent=5 // pred_check_branch
        %272 = sbr.rel (%p270) target = $region36
      $region35: #{tpu_custom_call.1} parent=5 // pred_region
        // Predicated region
        $region37: #{tpu_custom_call.1} parent=35 // pred_check
          %p273 = pneg %p62
        $region38: #{tpu_custom_call.1} parent=35 // pred_check_branch
          %275 = sbr.rel (%p273) target = $region40
        $region39: #{tpu_custom_call.1} parent=35 // pred_region
          %s276 = sand.u32 %s52, 1
          %s277 = sand.u32 %s52, 1
          %s278 = smul.addr %s277, 16
          %s279 = scalar_lea.vmem [#allocation6], %s278
          %s280 = smul.addr %s28, 4
          %s281 = sadd.s32 %s29, %s280
          %s282 = smul.addr %s281, 8
          %s283 = scalar_lea.vmem %s0, %s282
          // Predicated region
          $region41: #{tpu_custom_call.1} parent=39 // pred_check
            _
          $region42: #{tpu_custom_call.1} parent=39 // pred_check_branch
            %285 = sbr.rel (0) target = $region44
          $region43: #{tpu_custom_call.1} parent=39 // pred_region
            // Predicated region
            $region45: #{tpu_custom_call.1} parent=43 // pred_check
              _
            $region46: #{tpu_custom_call.1} parent=43 // pred_check_branch
              %287 = sbr.rel (0) target = $region48
            $region47: #{tpu_custom_call.1} parent=43 // pred_region
              // Predicated region
              $region60: #{tpu_custom_call.1} parent=47 // pred_check
                _
              $region61: #{tpu_custom_call.1} parent=47 // pred_check_branch
                %305 = sbr.rel (0) target = $region63
              $region62: #{tpu_custom_call.1} parent=47 // pred_region
                loop: start=0, step=1, limit=1
                $region64: #{tpu_custom_call.1} parent=62 // loop_pre_header
                  _
                $region65: #{tpu_custom_call.1} parent=62 // loop_header
                  %s307 = sphi 0, %s311
                  %p308 = scmp.ge.s32.totalorder %s307, 1
                  %s312 = sphi %s283, %s283
                  %s313 = sphi %s279, %s279
                $region66: #{tpu_custom_call.1} parent=62 // loop_header_branch
                  %310 = sbr.rel (%p308) target = $region70
                $region67: #{tpu_custom_call.1} parent=62 // loop_body
                  %v314 = vld [vmem:[%s312] sm:$0xff]
                  %315 = vst [vmem:[%s313] sm:$0xff] %v314
                  %v316 = vld [vmem:[%s312 + $0x10] sm:$0xff]
                  %317 = vst [vmem:[%s313 + $0x8] sm:$0xff] %v316
                $region68: #{tpu_custom_call.1} parent=62 // loop_footer
                  %s311 = sadd.s32 1, %s307
                $region69: #{tpu_custom_call.1} parent=62 // loop_footer_branch
                  %306 = sbr.rel target = $region65
                $region70: #{tpu_custom_call.1} parent=62 // loop_exit
                  _
              $region63: #{tpu_custom_call.1} parent=47 // pred_fallthru
                _
              // Predicated region
              $region71: #{tpu_custom_call.1} parent=47 // pred_check
                _
              $region72: #{tpu_custom_call.1} parent=47 // pred_check_branch
                %319 = sbr.rel target = $region74
              $region73: #{tpu_custom_call.1} parent=47 // pred_region
                _
              $region74: #{tpu_custom_call.1} parent=47 // pred_fallthru
                _
            $region48: #{tpu_custom_call.1} parent=43 // pred_fallthru
              _
            // Predicated region
            $region49: #{tpu_custom_call.1} parent=43 // pred_check
              _
            $region50: #{tpu_custom_call.1} parent=43 // pred_check_branch
              %289 = sbr.rel target = $region52
            $region51: #{tpu_custom_call.1} parent=43 // pred_region
              %s291 = ssub.s32 256, 1
              loop: start=0, step=1, limit=1
              $region53: #{tpu_custom_call.1} parent=51 // loop_pre_header
                _
              $region54: #{tpu_custom_call.1} parent=51 // loop_header
                %s293 = sphi 0, %s297
                %p294 = scmp.ge.s32.totalorder %s293, 1
                %s298 = sphi %s283, %s283
                %s299 = sphi %s279, %s279
              $region55: #{tpu_custom_call.1} parent=51 // loop_header_branch
                %296 = sbr.rel (%p294) target = $region59
              $region56: #{tpu_custom_call.1} parent=51 // loop_body
                %v300 = vld [vmem:[%s298] sm:%s291]
                %301 = vst [vmem:[%s299] sm:%s291] %v300
                %v302 = vld [vmem:[%s298 + $0x10] sm:%s291]
                %303 = vst [vmem:[%s299 + $0x8] sm:%s291] %v302
              $region57: #{tpu_custom_call.1} parent=51 // loop_footer
                %s297 = sadd.s32 1, %s293
              $region58: #{tpu_custom_call.1} parent=51 // loop_footer_branch
                %292 = sbr.rel target = $region54
              $region59: #{tpu_custom_call.1} parent=51 // loop_exit
                _
            $region52: #{tpu_custom_call.1} parent=43 // pred_fallthru
              _
          $region44: #{tpu_custom_call.1} parent=39 // pred_fallthru
            _
          %320 = vnop
        $region40: #{tpu_custom_call.1} parent=35 // pred_fallthru
          _
        // Predicated region
        $region75: #{tpu_custom_call.1} parent=35 // pred_check
          %p321 = pneg %p90
        $region76: #{tpu_custom_call.1} parent=35 // pred_check_branch
          %323 = sbr.rel (%p321) target = $region78
        $region77: #{tpu_custom_call.1} parent=35 // pred_region
          %s324 = sand.u32 %s80, 1
          %s325 = scalar_lea.sflag [#allocation8], %s324
          %s326 = sand.u32 %s80, 1
          %s327 = smul.addr %s326, 16
          %s328 = scalar_lea.vmem [#allocation7], %s327
          %s330 = ssub.s32 256, 256
          %331 = vsyncadd %s325, %s330
          %s332 = smul.addr %s28, 4
          %s333 = sadd.s32 %s30, %s332
          %s334 = smul.addr %s333, 128
          %s335 = scalar_lea.hbm %s1, %s334
          %s336 = sshll.u32 %s328, 4
          %s337 = int_to_ptr.vmem [resolvable:$true] %s336
          %342 = dma.hbm_to_vmem [thread:$0]  %s335, 256, %s337, %s325, 256, 128, 8
        $region78: #{tpu_custom_call.1} parent=35 // pred_fallthru
          _
      $region36: #{tpu_custom_call.1} parent=5 // pred_fallthru
        _
      %p343 = scmp.le.s32.totalorder 1, %s21
      %p344 = scmp.lt.s32.totalorder %s21, 9
      %p345 = pnand %p343, %p344
      %p346 = pneg %p345
      // Predicated region
      $region79: #{tpu_custom_call.1} parent=5 // pred_check
        _
      $region80: #{tpu_custom_call.1} parent=5 // pred_check_branch
        %348 = sbr.rel (%p345) target = $region82
      $region81: #{tpu_custom_call.1} parent=5 // pred_region
        %s349 = ssub.s32 %s21, 1
        %s350 = sand.u32 %s55, 1
        %s351 = sand.u32 %s55, 1
        %s352 = smul.addr %s351, 16
        %s353 = scalar_lea.vmem [#allocation6], %s352
        // Predicated region
        $region83: #{tpu_custom_call.1} parent=81 // pred_check
          %p354 = pneg %p68
        $region84: #{tpu_custom_call.1} parent=81 // pred_check_branch
          %356 = sbr.rel (%p354) target = $region86
        $region85: #{tpu_custom_call.1} parent=81 // pred_region
          _
        $region86: #{tpu_custom_call.1} parent=81 // pred_fallthru
          _
        %s357 = sand.u32 %s83, 1
        %s358 = scalar_lea.sflag [#allocation8], %s357
        %s359 = sand.u32 %s83, 1
        %s360 = smul.addr %s359, 16
        %s361 = scalar_lea.vmem [#allocation7], %s360
        // Predicated region
        $region87: #{tpu_custom_call.1} parent=81 // pred_check
          %p362 = pneg %p96
        $region88: #{tpu_custom_call.1} parent=81 // pred_check_branch
          %364 = sbr.rel (%p362) target = $region90
        $region89: #{tpu_custom_call.1} parent=81 // pred_region
          %365 = dma.done %s358, 256
        $region90: #{tpu_custom_call.1} parent=81 // pred_fallthru
          _
        // Predicated region
        $region91: #{tpu_custom_call.1} parent=81 // pred_check
          %p366 = pneg %p117
        $region92: #{tpu_custom_call.1} parent=81 // pred_check_branch
          %368 = sbr.rel (%p366) target = $region94
        $region93: #{tpu_custom_call.1} parent=81 // pred_region
          %369 = dma.done [#allocation11], 256
        $region94: #{tpu_custom_call.1} parent=81 // pred_fallthru
          _
        %s370 = sand.u32 %s55, 1
        %s371 = sand.u32 %s55, 1
        %s372 = smul.addr %s371, 16
        %s373 = scalar_lea.vmem [#allocation6], %s372
        %p374 = pneg %p68
        %p375 = pneg %p65
        %s376 = sand.u32 %s83, 1
        %s377 = scalar_lea.sflag [#allocation8], %s376
        %s378 = sand.u32 %s83, 1
        %s379 = smul.addr %s378, 16
        %s380 = scalar_lea.vmem [#allocation7], %s379
        %p381 = pneg %p96
        %p382 = pneg %p93
        %p383 = pneg %p117
        %p384 = pneg %p114
        %p385 = pneg %p138
        %p386 = pneg %p135
        %p387 = pneg %p159
        %p388 = pneg %p156
        %p389 = pneg %p180
        %p390 = pneg %p177
        %p391 = pneg %p201
        %p392 = pneg %p198
        %p393 = pneg %p229
        %p394 = pneg %p226
        %s395 = sand.u32 %s216, 1
        %s396 = scalar_lea.sflag [#allocation9], %s395
        %s397 = sand.u32 %s216, 1
        %s398 = smul.addr %s397, 16
        %s399 = scalar_lea.vmem [#allocation12], %s398
        %p400 = scmp.eq.s32.totalorder %s33, 0
        // Predicated region
        $region95: #{tpu_custom_call.1} parent=81 // pred_check
          %p401 = pneg %p400
        $region96: #{tpu_custom_call.1} parent=81 // pred_check_branch
          %403 = sbr.rel (%p401) target = $region98
        $region97: #{tpu_custom_call.1} parent=81 // pred_region
          %v404 = vld [vmem:[%s353] sm:$0xff]
          %v405 = vld [vmem:[%s353 + $0x8] sm:$0xff]
          %v406 = vld [vmem:[#allocation10] sm:$0xff]
          %v407 = vld [vmem:[#allocation10 + $0x8] sm:$0xff]
          %v408 = vld [vmem:[%s3] sm:$0xff]
          %v409 = vld [vmem:[%s3 + $0x8] sm:$0xff]
          %411 = vset.pattern.permute.xlu0 0
          %412 = vperm.xlu0 %411, %v408
          %v413 = vpop.permute.xlu0 %412
          %416 = vset.pattern.permute.xlu0 0
          %417 = vperm.xlu0 %416, %v409
          %v418 = vpop.permute.xlu0 %417
          %vm420 = vcmask 130048
          %v422 = vsel %vm420, %v406, 0
          %v425 = vsel %vm420, %v407, 0
          %427 = vmatprep.subr.mxu0 0.0
          %428 = vmatpush1.msra.mxu0 0.0
          %429 = vmatprep.subr.mxu0 0.0
          %430 = vmatpush1.msra.mxu0 0.0
          %431 = vmatprep.subr.mxu0 0.0
          %432 = vmatpush1.msra.mxu0 0.0
          %433 = vmatprep.subr.mxu0 0.0
          %434 = vmatpush1.msra.mxu0 0.0
          %435 = vmatprep.subr.mxu0 0.0
          %436 = vmatpush1.msra.mxu0 0.0
          %437 = vmatprep.subr.mxu0 0.0
          %438 = vmatpush1.msra.mxu0 0.0
          %439 = vmatprep.subr.mxu0 0.0
          %440 = vmatpush1.msra.mxu0 0.0
          %441 = vmatprep.subr.mxu0 0.0
          %442 = vmatpush1.msra.mxu0 0.0
          %443 = vmatprep.subr.mxu0 0.0
          %444 = vmatpush1.msra.mxu0 0.0
          %445 = vmatprep.subr.mxu0 0.0
          %446 = vmatpush1.msra.mxu0 0.0
          %447 = vmatprep.subr.mxu0 0.0
          %448 = vmatpush1.msra.mxu0 0.0
          %449 = vmatprep.subr.mxu0 0.0
          %450 = vmatpush1.msra.mxu0 0.0
          %451 = vmatprep.subr.mxu0 0.0
          %452 = vmatpush1.msra.mxu0 0.0
          %453 = vmatprep.subr.mxu0 0.0
          %454 = vmatpush1.msra.mxu0 0.0
          %455 = vmatprep.subr.mxu0 0.0
          %456 = vmatpush1.msra.mxu0 %v405
          %457 = vmatprep.subr.mxu0 0.0
          %458 = vmatpush1.msra.mxu0 %v404
          %459 = vmatprep.subr.mxu0 0.0
          %460 = vmatpush2.msra.mxu0 0.0
          %461 = vmatprep.subr.mxu0 0.0
          %462 = vmatpush2.msra.mxu0 0.0
          %463 = vmatprep.subr.mxu0 0.0
          %464 = vmatpush2.msra.mxu0 0.0
          %465 = vmatprep.subr.mxu0 0.0
          %466 = vmatpush2.msra.mxu0 0.0
          %467 = vmatprep.subr.mxu0 0.0
          %468 = vmatpush2.msra.mxu0 0.0
          %469 = vmatprep.subr.mxu0 0.0
          %470 = vmatpush2.msra.mxu0 0.0
          %471 = vmatprep.subr.mxu0 0.0
          %472 = vmatpush2.msra.mxu0 0.0
          %473 = vmatprep.subr.mxu0 0.0
          %474 = vmatpush2.msra.mxu0 0.0
          %475 = vmatprep.subr.mxu0 0.0
          %476 = vmatpush2.msra.mxu0 0.0
          %477 = vmatprep.subr.mxu0 0.0
          %478 = vmatpush2.msra.mxu0 0.0
          %479 = vmatprep.subr.mxu0 0.0
          %480 = vmatpush2.msra.mxu0 0.0
          %481 = vmatprep.subr.mxu0 0.0
          %482 = vmatpush2.msra.mxu0 0.0
          %483 = vmatprep.subr.mxu0 0.0
          %484 = vmatpush2.msra.mxu0 0.0
          %485 = vmatprep.subr.mxu0 0.0
          %486 = vmatpush2.msra.mxu0 0.0
          %487 = vmatprep.subr.mxu0 0.0
          %488 = vmatpush2.msra.mxu0 0.0
          %489 = vmatprep.subr.mxu0 0.0
          %490 = vmatpush2.msra.mxu0 0.0
          %491 = vmatprep.mubr.f32.mxu0 0.0
          %492 = vmatmul.mubr.f32.gmra.mxu0 %v422
          %v493 = vpop.f32.mrf.mxu0
          %v494 = vadd.f32 %v413, %v493
          %v495 = vpop.f32.mrf.mxu0
          %496 = vmatprep.mubr.f32.mxu0 0.0
          %497 = vmatmul.mubr.f32.gmra.mxu0 %v425
          %v498 = vpop.f32.mrf.mxu0
          %v499 = vadd.f32 %v418, %v498
          %v500 = vpop.f32.mrf.mxu0
          %501 = vdwg.mxu0
          %502 = vst [vmem:[#allocation2] sm:$0xff] %v494
          %503 = vst [vmem:[#allocation2 + $0x8] sm:$0xff] %v499
          %504 = vst [vmem:[#allocation3] sm:$0x1] -inf
          %505 = vst [vmem:[#allocation4] sm:$0xff] 0.0
          %506 = vst [vmem:[#allocation4 + $0x8] sm:$0xff] 0.0
          %507 = vst [vmem:[#allocation4 + $0x10] sm:$0xff] 0.0
        $region98: #{tpu_custom_call.1} parent=81 // pred_fallthru
          _
        %v508 = vld [vmem:[%s361] sm:$0xff]
        %v509 = vld [vmem:[%s361 + $0x8] sm:$0xff]
        %v510 = vld [vmem:[%s4] sm:$0xff]
        %v511 = vld [vmem:[%s4 + $0x8] sm:$0xff]
        %v512 = vld [vmem:[%s4 + $0x10] sm:$0xff]
        %v513 = vld [vmem:[%s5] sm:$0xff]
        %v514 = vld [vmem:[%s5 + $0x8] sm:$0xff]
        %v515 = vld [vmem:[%s5 + $0x10] sm:$0xff]
        %517 = vset.pattern.permute.xlu0 0
        %518 = vperm.xlu0 %517, %v513
        %v519 = vpop.permute.xlu0 %518
        %522 = vset.pattern.permute.xlu0 0
        %523 = vperm.xlu0 %522, %v514
        %v524 = vpop.permute.xlu0 %523
        %527 = vset.pattern.permute.xlu0 0
        %528 = vperm.xlu0 %527, %v515
        %v529 = vpop.permute.xlu0 %528
        %vm531 = vcmask 130048
        %v533 = vsel %vm531, %v510, 0
        %v536 = vsel %vm531, %v511, 0
        %v539 = vsel %vm531, %v512, 0
        %541 = vmatprep.subr.mxu0 0.0
        %542 = vmatpush1.msra.mxu0 0.0
        %543 = vmatprep.subr.mxu0 0.0
        %544 = vmatpush1.msra.mxu0 0.0
        %545 = vmatprep.subr.mxu0 0.0
        %546 = vmatpush1.msra.mxu0 0.0
        %547 = vmatprep.subr.mxu0 0.0
        %548 = vmatpush1.msra.mxu0 0.0
        %549 = vmatprep.subr.mxu0 0.0
        %550 = vmatpush1.msra.mxu0 0.0
        %551 = vmatprep.subr.mxu0 0.0
        %552 = vmatpush1.msra.mxu0 0.0
        %553 = vmatprep.subr.mxu0 0.0
        %554 = vmatpush1.msra.mxu0 0.0
        %555 = vmatprep.subr.mxu0 0.0
        %556 = vmatpush1.msra.mxu0 0.0
        %557 = vmatprep.subr.mxu0 0.0
        %558 = vmatpush1.msra.mxu0 0.0
        %559 = vmatprep.subr.mxu0 0.0
        %560 = vmatpush1.msra.mxu0 0.0
        %561 = vmatprep.subr.mxu0 0.0
        %562 = vmatpush1.msra.mxu0 0.0
        %563 = vmatprep.subr.mxu0 0.0
        %564 = vmatpush1.msra.mxu0 0.0
        %565 = vmatprep.subr.mxu0 0.0
        %566 = vmatpush1.msra.mxu0 0.0
        %567 = vmatprep.subr.mxu0 0.0
        %568 = vmatpush1.msra.mxu0 0.0
        %569 = vmatprep.subr.mxu0 0.0
        %570 = vmatpush1.msra.mxu0 %v509
        %571 = vmatprep.subr.mxu0 0.0
        %572 = vmatpush1.msra.mxu0 %v508
        %573 = vmatprep.subr.mxu0 0.0
        %574 = vmatpush2.msra.mxu0 0.0
        %575 = vmatprep.subr.mxu0 0.0
        %576 = vmatpush2.msra.mxu0 0.0
        %577 = vmatprep.subr.mxu0 0.0
        %578 = vmatpush2.msra.mxu0 0.0
        %579 = vmatprep.subr.mxu0 0.0
        %580 = vmatpush2.msra.mxu0 0.0
        %581 = vmatprep.subr.mxu0 0.0
        %582 = vmatpush2.msra.mxu0 0.0
        %583 = vmatprep.subr.mxu0 0.0
        %584 = vmatpush2.msra.mxu0 0.0
        %585 = vmatprep.subr.mxu0 0.0
        %586 = vmatpush2.msra.mxu0 0.0
        %587 = vmatprep.subr.mxu0 0.0
        %588 = vmatpush2.msra.mxu0 0.0
        %589 = vmatprep.subr.mxu0 0.0
        %590 = vmatpush2.msra.mxu0 0.0
        %591 = vmatprep.subr.mxu0 0.0
        %592 = vmatpush2.msra.mxu0 0.0
        %593 = vmatprep.subr.mxu0 0.0
        %594 = vmatpush2.msra.mxu0 0.0
        %595 = vmatprep.subr.mxu0 0.0
        %596 = vmatpush2.msra.mxu0 0.0
        %597 = vmatprep.subr.mxu0 0.0
        %598 = vmatpush2.msra.mxu0 0.0
        %599 = vmatprep.subr.mxu0 0.0
        %600 = vmatpush2.msra.mxu0 0.0
        %601 = vmatprep.subr.mxu0 0.0
        %602 = vmatpush2.msra.mxu0 0.0
        %603 = vmatprep.subr.mxu0 0.0
        %604 = vmatpush2.msra.mxu0 0.0
        %605 = vmatprep.mubr.f32.mxu0 0.0
        %606 = vmatmul.mubr.f32.gmra.mxu0 %v533
        %v607 = vpop.f32.mrf.mxu0
        %v608 = vadd.f32 %v519, %v607
        %v609 = vpop.f32.mrf.mxu0
        %610 = vmatprep.mubr.f32.mxu0 0.0
        %611 = vmatmul.mubr.f32.gmra.mxu0 %v536
        %v612 = vpop.f32.mrf.mxu0
        %v613 = vadd.f32 %v524, %v612
        %v614 = vpop.f32.mrf.mxu0
        %615 = vmatprep.mubr.f32.mxu0 0.0
        %616 = vmatmul.mubr.f32.gmra.mxu0 %v539
        %v617 = vpop.f32.mrf.mxu0
        %v618 = vadd.f32 %v529, %v617
        %v619 = vpop.f32.mrf.mxu0
        %620 = vdwg.mxu0
        %v621 = vld [vmem:[#allocation2] sm:$0xff]
        %v622 = vld [vmem:[#allocation2 + $0x8] sm:$0xff]
        %623 = vxpose.xlu0.b32.start [1/16] %v508, 128
        %624 = vxpose.xlu0.b32.cont [2/16] %v509, 128
        %625 = vxpose.xlu0.b32.cont [3/16] 0.0, 128
        %626 = vxpose.xlu0.b32.cont [4/16] 0.0, 128
        %627 = vxpose.xlu0.b32.cont [5/16] 0.0, 128
        %628 = vxpose.xlu0.b32.cont [6/16] 0.0, 128
        %629 = vxpose.xlu0.b32.cont [7/16] 0.0, 128
        %630 = vxpose.xlu0.b32.cont [8/16] 0.0, 128
        %631 = vxpose.xlu0.b32.cont [9/16] 0.0, 128
        %632 = vxpose.xlu0.b32.cont [10/16] 0.0, 128
        %633 = vxpose.xlu0.b32.cont [11/16] 0.0, 128
        %634 = vxpose.xlu0.b32.cont [12/16] 0.0, 128
        %635 = vxpose.xlu0.b32.cont [13/16] 0.0, 128
        %636 = vxpose.xlu0.b32.cont [14/16] 0.0, 128
        %637 = vxpose.xlu0.b32.cont [15/16] 0.0, 128
        %638 = vxpose.xlu0.b32.end [16/16] 0.0, 128
        %v639 = vpop.trf.xlu0
        %v640 = vpop.trf.xlu0
        %v641 = vpop.trf.xlu0
        %v642 = vpop.trf.xlu0
        %v643 = vpop.trf.xlu0
        %v644 = vpop.trf.xlu0
        %v645 = vpop.trf.xlu0
        %v646 = vpop.trf.xlu0
        %v647 = vpop.trf.xlu0
        %v648 = vpop.trf.xlu0
        %v649 = vpop.trf.xlu0
        %v650 = vpop.trf.xlu0
        %v651 = vpop.trf.xlu0
        %v652 = vpop.trf.xlu0
        %v653 = vpop.trf.xlu0
        %v654 = vpop.trf.xlu0
        %v656 = vsel %vm531, %v639, 0
        %v659 = vsel %vm531, %v640, 0
        %v662 = vsel %vm531, %v641, 0
        %v665 = vsel %vm531, %v642, 0
        %v668 = vsel %vm531, %v643, 0
        %v671 = vsel %vm531, %v644, 0
        %v674 = vsel %vm531, %v645, 0
        %v677 = vsel %vm531, %v646, 0
        %v680 = vsel %vm531, %v647, 0
        %v683 = vsel %vm531, %v648, 0
        %v686 = vsel %vm531, %v649, 0
        %v689 = vsel %vm531, %v650, 0
        %v692 = vsel %vm531, %v651, 0
        %v695 = vsel %vm531, %v652, 0
        %v698 = vsel %vm531, %v653, 0
        %v701 = vsel %vm531, %v654, 0
        %703 = vmatprep.subr.mxu0 0.0
        %704 = vmatpush1.msra.mxu0 0.0
        %705 = vmatprep.subr.mxu0 0.0
        %706 = vmatpush1.msra.mxu0 0.0
        %707 = vmatprep.subr.mxu0 0.0
        %708 = vmatpush1.msra.mxu0 0.0
        %709 = vmatprep.subr.mxu0 0.0
        %710 = vmatpush1.msra.mxu0 0.0
        %711 = vmatprep.subr.mxu0 0.0
        %712 = vmatpush1.msra.mxu0 0.0
        %713 = vmatprep.subr.mxu0 0.0
        %714 = vmatpush1.msra.mxu0 0.0
        %715 = vmatprep.subr.mxu0 0.0
        %716 = vmatpush1.msra.mxu0 0.0
        %717 = vmatprep.subr.mxu0 0.0
        %718 = vmatpush1.msra.mxu0 0.0
        %719 = vmatprep.subr.mxu0 0.0
        %720 = vmatpush1.msra.mxu0 0.0
        %721 = vmatprep.subr.mxu0 0.0
        %722 = vmatpush1.msra.mxu0 0.0
        %723 = vmatprep.subr.mxu0 0.0
        %724 = vmatpush1.msra.mxu0 0.0
        %725 = vmatprep.subr.mxu0 0.0
        %726 = vmatpush1.msra.mxu0 0.0
        %727 = vmatprep.subr.mxu0 0.0
        %728 = vmatpush1.msra.mxu0 0.0
        %729 = vmatprep.subr.mxu0 0.0
        %730 = vmatpush1.msra.mxu0 0.0
        %731 = vmatprep.subr.mxu0 0.0
        %732 = vmatpush1.msra.mxu0 %v622
        %733 = vmatprep.subr.mxu0 0.0
        %734 = vmatpush1.msra.mxu0 %v621
        %735 = vmatprep.subr.mxu0 0.0
        %736 = vmatpush2.msra.mxu0 0.0
        %737 = vmatprep.subr.mxu0 0.0
        %738 = vmatpush2.msra.mxu0 0.0
        %739 = vmatprep.subr.mxu0 0.0
        %740 = vmatpush2.msra.mxu0 0.0
        %741 = vmatprep.subr.mxu0 0.0
        %742 = vmatpush2.msra.mxu0 0.0
        %743 = vmatprep.subr.mxu0 0.0
        %744 = vmatpush2.msra.mxu0 0.0
        %745 = vmatprep.subr.mxu0 0.0
        %746 = vmatpush2.msra.mxu0 0.0
        %747 = vmatprep.subr.mxu0 0.0
        %748 = vmatpush2.msra.mxu0 0.0
        %749 = vmatprep.subr.mxu0 0.0
        %750 = vmatpush2.msra.mxu0 0.0
        %751 = vmatprep.subr.mxu0 0.0
        %752 = vmatpush2.msra.mxu0 0.0
        %753 = vmatprep.subr.mxu0 0.0
        %754 = vmatpush2.msra.mxu0 0.0
        %755 = vmatprep.subr.mxu0 0.0
        %756 = vmatpush2.msra.mxu0 0.0
        %757 = vmatprep.subr.mxu0 0.0
        %758 = vmatpush2.msra.mxu0 0.0
        %759 = vmatprep.subr.mxu0 0.0
        %760 = vmatpush2.msra.mxu0 0.0
        %761 = vmatprep.subr.mxu0 0.0
        %762 = vmatpush2.msra.mxu0 0.0
        %763 = vmatprep.subr.mxu0 0.0
        %764 = vmatpush2.msra.mxu0 0.0
        %765 = vmatprep.subr.mxu0 0.0
        %766 = vmatpush2.msra.mxu0 0.0
        %767 = vmatprep.mubr.f32.mxu0 0.0
        %768 = vmatmul.mubr.f32.gmra.mxu0 %v656
        %v769 = vpop.f32.mrf.mxu0
        %v770 = vadd.f32 0.0, %v769
        %v771 = vpop.f32.mrf.mxu0
        %772 = vmatprep.mubr.f32.mxu0 0.0
        %773 = vmatmul.mubr.f32.gmra.mxu0 %v659
        %v774 = vpop.f32.mrf.mxu0
        %v775 = vadd.f32 0.0, %v774
        %v776 = vpop.f32.mrf.mxu0
        %777 = vmatprep.mubr.f32.mxu0 0.0
        %778 = vmatmul.mubr.f32.gmra.mxu0 %v662
        %v779 = vpop.f32.mrf.mxu0
        %v780 = vadd.f32 0.0, %v779
        %v781 = vpop.f32.mrf.mxu0
        %782 = vmatprep.mubr.f32.mxu0 0.0
        %783 = vmatmul.mubr.f32.gmra.mxu0 %v665
        %v784 = vpop.f32.mrf.mxu0
        %v785 = vadd.f32 0.0, %v784
        %v786 = vpop.f32.mrf.mxu0
        %787 = vmatprep.mubr.f32.mxu0 0.0
        %788 = vmatmul.mubr.f32.gmra.mxu0 %v668
        %v789 = vpop.f32.mrf.mxu0
        %v790 = vadd.f32 0.0, %v789
        %v791 = vpop.f32.mrf.mxu0
        %792 = vmatprep.mubr.f32.mxu0 0.0
        %793 = vmatmul.mubr.f32.gmra.mxu0 %v671
        %v794 = vpop.f32.mrf.mxu0
        %v795 = vadd.f32 0.0, %v794
        %v796 = vpop.f32.mrf.mxu0
        %797 = vmatprep.mubr.f32.mxu0 0.0
        %798 = vmatmul.mubr.f32.gmra.mxu0 %v674
        %v799 = vpop.f32.mrf.mxu0
        %v800 = vadd.f32 0.0, %v799
        %v801 = vpop.f32.mrf.mxu0
        %802 = vmatprep.mubr.f32.mxu0 0.0
        %803 = vmatmul.mubr.f32.gmra.mxu0 %v677
        %v804 = vpop.f32.mrf.mxu0
        %v805 = vadd.f32 0.0, %v804
        %v806 = vpop.f32.mrf.mxu0
        %807 = vmatprep.mubr.f32.mxu0 0.0
        %808 = vmatmul.mubr.f32.gmra.mxu0 %v680
        %v809 = vpop.f32.mrf.mxu0
        %v810 = vadd.f32 0.0, %v809
        %v811 = vpop.f32.mrf.mxu0
        %812 = vmatprep.mubr.f32.mxu0 0.0
        %813 = vmatmul.mubr.f32.gmra.mxu0 %v683
        %v814 = vpop.f32.mrf.mxu0
        %v815 = vadd.f32 0.0, %v814
        %v816 = vpop.f32.mrf.mxu0
        %817 = vmatprep.mubr.f32.mxu0 0.0
        %818 = vmatmul.mubr.f32.gmra.mxu0 %v686
        %v819 = vpop.f32.mrf.mxu0
        %v820 = vadd.f32 0.0, %v819
        %v821 = vpop.f32.mrf.mxu0
        %822 = vmatprep.mubr.f32.mxu0 0.0
        %823 = vmatmul.mubr.f32.gmra.mxu0 %v689
        %v824 = vpop.f32.mrf.mxu0
        %v825 = vadd.f32 0.0, %v824
        %v826 = vpop.f32.mrf.mxu0
        %827 = vmatprep.mubr.f32.mxu0 0.0
        %828 = vmatmul.mubr.f32.gmra.mxu0 %v692
        %v829 = vpop.f32.mrf.mxu0
        %v830 = vadd.f32 0.0, %v829
        %v831 = vpop.f32.mrf.mxu0
        %832 = vmatprep.mubr.f32.mxu0 0.0
        %833 = vmatmul.mubr.f32.gmra.mxu0 %v695
        %v834 = vpop.f32.mrf.mxu0
        %v835 = vadd.f32 0.0, %v834
        %v836 = vpop.f32.mrf.mxu0
        %837 = vmatprep.mubr.f32.mxu0 0.0
        %838 = vmatmul.mubr.f32.gmra.mxu0 %v698
        %v839 = vpop.f32.mrf.mxu0
        %v840 = vadd.f32 0.0, %v839
        %v841 = vpop.f32.mrf.mxu0
        %842 = vmatprep.mubr.f32.mxu0 0.0
        %843 = vmatmul.mubr.f32.gmra.mxu0 %v701
        %v844 = vpop.f32.mrf.mxu0
        %v845 = vadd.f32 0.0, %v844
        %v846 = vpop.f32.mrf.mxu0
        %847 = vdwg.mxu0
        %v848 = vld [vmem:[#allocation3] sm:$0x1]
        %v849 = vmax.f32 %v770, %v790
        %v850 = vmax.f32 %v775, %v795
        %v851 = vmax.f32 %v780, %v800
        %v852 = vmax.f32 %v785, %v805
        %v853 = vmax.f32 %v849, %v810
        %v854 = vmax.f32 %v850, %v815
        %v855 = vmax.f32 %v851, %v820
        %v856 = vmax.f32 %v852, %v825
        %v857 = vmax.f32 %v853, %v830
        %v858 = vmax.f32 %v854, %v835
        %v859 = vmax.f32 %v855, %v840
        %v860 = vmax.f32 %v856, %v845
        %v861 = vmax.f32 %v857, %v858
        %v862 = vmax.f32 %v859, %v860
        %v863 = vmax.f32 %v861, %v862
        %v864 = vrot.slane %v863, 4
        %v865 = vmax.f32 %v863, %v864
        %v866 = vrot.slane %v865, 2
        %v867 = vmax.f32 %v865, %v866
        %v868 = vrot.slane %v867, 1
        %v869 = vmax.f32 %v867, %v868
        %v870 = vmax.f32 %v848, %v869
        %v871 = vsub.f32 %v848, %v870
        %v872 = vmul.f32 %v871, 1.442695
        %v873 = vpow.pop %v872
        %v875 = vlaneseq
        %v876 = vshrl.u32 %v875, 7
        %v877 = vsub.s32 0, %v876
        %v878 = vrot.slane %v870, %v877
        %v880 = vsub.f32 %v770, %v878
        %v881 = vsub.f32 %v775, %v878
        %v882 = vsub.f32 %v780, %v878
        %v883 = vsub.f32 %v785, %v878
        %v884 = vsub.f32 %v790, %v878
        %v885 = vsub.f32 %v795, %v878
        %v886 = vsub.f32 %v800, %v878
        %v887 = vsub.f32 %v805, %v878
        %v888 = vsub.f32 %v810, %v878
        %v889 = vsub.f32 %v815, %v878
        %v890 = vsub.f32 %v820, %v878
        %v891 = vsub.f32 %v825, %v878
        %v892 = vsub.f32 %v830, %v878
        %v893 = vsub.f32 %v835, %v878
        %v894 = vsub.f32 %v840, %v878
        %v895 = vsub.f32 %v845, %v878
        %v896 = vmul.f32 %v880, 1.442695
        %v897 = vpow.pop %v896
        %v898 = vmul.f32 %v881, 1.442695
        %v899 = vpow.pop %v898
        %v900 = vmul.f32 %v882, 1.442695
        %v901 = vpow.pop %v900
        %v902 = vmul.f32 %v883, 1.442695
        %v903 = vpow.pop %v902
        %v904 = vmul.f32 %v884, 1.442695
        %v905 = vpow.pop %v904
        %v906 = vmul.f32 %v885, 1.442695
        %v907 = vpow.pop %v906
        %v908 = vmul.f32 %v886, 1.442695
        %v909 = vpow.pop %v908
        %v910 = vmul.f32 %v887, 1.442695
        %v911 = vpow.pop %v910
        %v912 = vmul.f32 %v888, 1.442695
        %v913 = vpow.pop %v912
        %v914 = vmul.f32 %v889, 1.442695
        %v915 = vpow.pop %v914
        %v916 = vmul.f32 %v890, 1.442695
        %v917 = vpow.pop %v916
        %v918 = vmul.f32 %v891, 1.442695
        %v919 = vpow.pop %v918
        %v920 = vmul.f32 %v892, 1.442695
        %v921 = vpow.pop %v920
        %v922 = vmul.f32 %v893, 1.442695
        %v923 = vpow.pop %v922
        %v924 = vmul.f32 %v894, 1.442695
        %v925 = vpow.pop %v924
        %v926 = vmul.f32 %v895, 1.442695
        %v927 = vpow.pop %v926
        %v928 = vld [vmem:[#allocation4] sm:$0xff]
        %v929 = vld [vmem:[#allocation4 + $0x8] sm:$0xff]
        %v930 = vld [vmem:[#allocation4 + $0x10] sm:$0xff]
        %v932 = vlaneseq
        %v933 = vshrl.u32 %v932, 7
        %v934 = vsub.s32 0, %v933
        %v935 = vrot.slane %v873, %v934
        %v937 = vmul.f32 %v935, %v928
        %v938 = vmul.f32 %v935, %v929
        %v939 = vmul.f32 %v935, %v930
        %940 = vmatprep.subr.mxu0 0.0
        %941 = vmatpush1.msra.mxu0 %v927
        %942 = vmatprep.subr.mxu0 0.0
        %943 = vmatpush1.msra.mxu0 %v925
        %944 = vmatprep.subr.mxu0 0.0
        %945 = vmatpush1.msra.mxu0 %v923
        %946 = vmatprep.subr.mxu0 0.0
        %947 = vmatpush1.msra.mxu0 %v921
        %948 = vmatprep.subr.mxu0 0.0
        %949 = vmatpush1.msra.mxu0 %v919
        %950 = vmatprep.subr.mxu0 0.0
        %951 = vmatpush1.msra.mxu0 %v917
        %952 = vmatprep.subr.mxu0 0.0
        %953 = vmatpush1.msra.mxu0 %v915
        %954 = vmatprep.subr.mxu0 0.0
        %955 = vmatpush1.msra.mxu0 %v913
        %956 = vmatprep.subr.mxu0 0.0
        %957 = vmatpush1.msra.mxu0 %v911
        %958 = vmatprep.subr.mxu0 0.0
        %959 = vmatpush1.msra.mxu0 %v909
        %960 = vmatprep.subr.mxu0 0.0
        %961 = vmatpush1.msra.mxu0 %v907
        %962 = vmatprep.subr.mxu0 0.0
        %963 = vmatpush1.msra.mxu0 %v905
        %964 = vmatprep.subr.mxu0 0.0
        %965 = vmatpush1.msra.mxu0 %v903
        %966 = vmatprep.subr.mxu0 0.0
        %967 = vmatpush1.msra.mxu0 %v901
        %968 = vmatprep.subr.mxu0 0.0
        %969 = vmatpush1.msra.mxu0 %v899
        %970 = vmatprep.subr.mxu0 0.0
        %971 = vmatpush1.msra.mxu0 %v897
        %972 = vmatprep.subr.mxu0 0.0
        %973 = vmatpush2.msra.mxu0 0.0
        %974 = vmatprep.subr.mxu0 0.0
        %975 = vmatpush2.msra.mxu0 0.0
        %976 = vmatprep.subr.mxu0 0.0
        %977 = vmatpush2.msra.mxu0 0.0
        %978 = vmatprep.subr.mxu0 0.0
        %979 = vmatpush2.msra.mxu0 0.0
        %980 = vmatprep.subr.mxu0 0.0
        %981 = vmatpush2.msra.mxu0 0.0
        %982 = vmatprep.subr.mxu0 0.0
        %983 = vmatpush2.msra.mxu0 0.0
        %984 = vmatprep.subr.mxu0 0.0
        %985 = vmatpush2.msra.mxu0 0.0
        %986 = vmatprep.subr.mxu0 0.0
        %987 = vmatpush2.msra.mxu0 0.0
        %988 = vmatprep.subr.mxu0 0.0
        %989 = vmatpush2.msra.mxu0 0.0
        %990 = vmatprep.subr.mxu0 0.0
        %991 = vmatpush2.msra.mxu0 0.0
        %992 = vmatprep.subr.mxu0 0.0
        %993 = vmatpush2.msra.mxu0 0.0
        %994 = vmatprep.subr.mxu0 0.0
        %995 = vmatpush2.msra.mxu0 0.0
        %996 = vmatprep.subr.mxu0 0.0
        %997 = vmatpush2.msra.mxu0 0.0
        %998 = vmatprep.subr.mxu0 0.0
        %999 = vmatpush2.msra.mxu0 0.0
        %1000 = vmatprep.subr.mxu0 0.0
        %1001 = vmatpush2.msra.mxu0 0.0
        %1002 = vmatprep.subr.mxu0 0.0
        %1003 = vmatpush2.msra.mxu0 0.0
        %1004 = vmatprep.mubr.f32.mxu0 0.0
        %1005 = vmatmul.mubr.f32.gmra.mxu0 %v608
        %v1006 = vpop.f32.mrf.mxu0
        %v1007 = vadd.f32 0.0, %v1006
        %v1008 = vpop.f32.mrf.mxu0
        %1009 = vmatprep.mubr.f32.mxu0 0.0
        %1010 = vmatmul.mubr.f32.gmra.mxu0 %v613
        %v1011 = vpop.f32.mrf.mxu0
        %v1012 = vadd.f32 0.0, %v1011
        %v1013 = vpop.f32.mrf.mxu0
        %1014 = vmatprep.mubr.f32.mxu0 0.0
        %1015 = vmatmul.mubr.f32.gmra.mxu0 %v618
        %v1016 = vpop.f32.mrf.mxu0
        %v1017 = vadd.f32 0.0, %v1016
        %v1018 = vpop.f32.mrf.mxu0
        %1019 = vdwg.mxu0
        %v1020 = vadd.f32 %v937, %v1007
        %v1021 = vadd.f32 %v938, %v1012
        %v1022 = vadd.f32 %v939, %v1017
        %1023 = vst [vmem:[#allocation4] sm:$0xff] %v1020
        %1024 = vst [vmem:[#allocation4 + $0x8] sm:$0xff] %v1021
        %1025 = vst [vmem:[#allocation4 + $0x10] sm:$0xff] %v1022
        %1026 = vst [vmem:[#allocation3] sm:$0x1] %v870
        %p1027 = scmp.eq.s32.totalorder %s33, 1
        // Predicated region
        $region99: #{tpu_custom_call.1} parent=81 // pred_check
          %p1028 = pneg %p1027
        $region100: #{tpu_custom_call.1} parent=81 // pred_check_branch
          %1030 = sbr.rel (%p1028) target = $region102
        $region101: #{tpu_custom_call.1} parent=81 // pred_region
          %v1031 = vld [vmem:[%s353] sm:$0xff]
          %v1032 = vld [vmem:[%s353 + $0x8] sm:$0xff]
          %v1033 = vld [vmem:[#allocation4 + $0x10] sm:$0x1]
          %s1034 = sld [smem:[#allocation5]]
          %v1035 = vrcp.pop %v1033
          %v1036 = vstv %s1034
          %v1037 = vmul.f32 %v1036, %v1035
          %v1038 = vld [vmem:[#allocation4] sm:$0xff]
          %v1039 = vld [vmem:[#allocation4 + $0x8] sm:$0xff]
          %v1040 = vlaneseq
          %v1041 = vshrl.u32 %v1040, 7
          %v1042 = vsub.s32 0, %v1041
          %v1043 = vrot.slane %v1037, %v1042
          %v1044 = vmul.f32 %v1038, %v1043
          %v1045 = vmul.f32 %v1039, %v1043
          %v1046 = vadd.f32 %v1044, %v1031
          %v1047 = vadd.f32 %v1045, %v1032
          %1048 = vst [vmem:[%s399] sm:$0xff] %v1046
          %1049 = vst [vmem:[%s399 + $0x8] sm:$0xff] %v1047
        $region102: #{tpu_custom_call.1} parent=81 // pred_fallthru
          _
        %s1050 = sand.u32 %s216, 1
        %s1051 = scalar_lea.sflag [#allocation9], %s1050
        %s1052 = sand.u32 %s216, 1
        %s1053 = smul.addr %s1052, 16
        %s1054 = scalar_lea.vmem [#allocation12], %s1053
        // Predicated region
        $region103: #{tpu_custom_call.1} parent=81 // pred_check
          %p1055 = pneg %p226
        $region104: #{tpu_custom_call.1} parent=81 // pred_check_branch
          %1057 = sbr.rel (%p1055) target = $region106
        $region105: #{tpu_custom_call.1} parent=81 // pred_region
          %s1059 = ssub.s32 256, 256
          %1060 = vsyncadd %s1051, %s1059
          %s1061 = smul.addr %s31, 4
          %s1062 = sadd.s32 %s32, %s1061
          %s1063 = smul.addr %s1062, 128
          %s1064 = scalar_lea.hbm %s7, %s1063
          %s1065 = sshll.u32 %s1054, 4
          %s1066 = int_to_ptr.vmem [resolvable:$true] %s1065
          %1071 = dma.vmem_to_hbm [thread:$0]  %s1066, 256, %s1064, %s1051, 128, 256, 8
        $region106: #{tpu_custom_call.1} parent=81 // pred_fallthru
          _
      $region82: #{tpu_custom_call.1} parent=5 // pred_fallthru
        _
      %p1072 = scmp.le.s32.totalorder 2, %s21
      // Predicated region
      $region107: #{tpu_custom_call.1} parent=5 // pred_check
        %p1073 = pneg %p1072
      $region108: #{tpu_custom_call.1} parent=5 // pred_check_branch
        %1075 = sbr.rel (%p1073) target = $region110
      $region109: #{tpu_custom_call.1} parent=5 // pred_region
        %s1076 = ssub.s32 %s21, 2
        // Predicated region
        $region111: #{tpu_custom_call.1} parent=109 // pred_check
          %p1077 = pneg %p232
        $region112: #{tpu_custom_call.1} parent=109 // pred_check_branch
          %1079 = sbr.rel (%p1077) target = $region114
        $region113: #{tpu_custom_call.1} parent=109 // pred_region
          %s1080 = sand.u32 %s217, 1
          %s1081 = scalar_lea.sflag [#allocation9], %s1080
          %s1082 = sand.u32 %s217, 1
          %s1083 = smul.addr %s1082, 16
          %s1084 = scalar_lea.vmem [#allocation12], %s1083
          %1085 = dma.done %s1081, 256
        $region114: #{tpu_custom_call.1} parent=109 // pred_fallthru
          _
      $region110: #{tpu_custom_call.1} parent=5 // pred_fallthru
        _
    $region6: #{tpu_custom_call.1} parent=1 // loop_footer
      %s25 = sadd.s32 1, %s21
    $region7: #{tpu_custom_call.1} parent=1 // loop_footer_branch
      %20 = sbr.rel target = $region3
    $region8: #{tpu_custom_call.1} parent=1 // loop_exit
      _
    %1086 = vsyncpa [#allocation8], 1
    %s1087 = scalar_lea.sflag [#allocation8], 1
    %1088 = vsyncpa %s1087, 1
    %1089 = vsyncpa [#allocation11], 1
    %1090 = vsyncpa [#allocation9], 1
    %s1091 = scalar_lea.sflag [#allocation9], 1
    %1092 = vsyncpa %s1091, 1

</llo_original>
